<compile_context>
chip_gen: v6e
topology: v6e:2x2x1
jax: 0.10.0
libtpu: 0.0.40
codegen_flags: <defaults>
</compile_context>

<pallas_src>
import functools

import numpy as np
import jax
import jax.numpy as jnp
from jax.experimental import pallas as pl
from jax.experimental.pallas import tpu as pltpu


# ------------------------------ fused kernel --------------------------------

def _fused_net_kernel(x_ref, w1_ref, b1_ref, w2_ref, b2_ref,
                      fc1w_ref, fc1b_ref, fc2w_ref, fc2b_ref,
                      fc3w_ref, fc3b_ref, out_ref,
                      c1_ref, p1_ref, c2_ref, p2_ref,
                      *, tb, k, ow1, c1, ph1p, ow2, c2, ph2, p2w):
    f32 = jnp.float32
    bf16 = jnp.bfloat16
    rows2 = tb * ph1p                      # pool1 / conv2 rows (ph1p-row sample blocks)

    # ---- conv1 + bias: one batch-wide MXU matmul -----------------------------
    # x_ref rows = (sample, image row); lanes = k row-shifts * (col*cin + ci)
    # (im2col folded in the wrapper), so K = k*W*Cin in a single pass.
    c1_ref[...] = jnp.dot(x_ref[...], w1_ref[...],
                          preferred_element_type=f32) + b1_ref[...]

    # ---- maxpool 2x2/2 + relu on conv1, batch-wide ---------------------------
    # Each sample's h = 2*ph1p conv1 rows map straight onto its ph1p pool1 rows via a
    # single stride-2 read over the whole tile; column pairs via a lane shift of c1.
    rmax = jnp.maximum(c1_ref[pl.ds(0, rows2, stride=2), :],
                       c1_ref[pl.ds(1, rows2, stride=2), :])
    cmax = jnp.maximum(rmax[:, :(ow1 - 1) * c1], rmax[:, c1:])
    p1_ref[0:rows2, :] = jnp.maximum(cmax, 0.0).astype(bf16)
    # zero the alignment-pad rows that the shifted conv2 matmuls read past the end
    pad_rows = p1_ref.shape[0] - rows2
    p1_ref[rows2:rows2 + pad_rows, :] = jnp.zeros((pad_rows, p1_ref.shape[1]), bf16)

    # ---- conv2 + bias: k batch-wide row-shifted matmuls ----------------------
    # Junk lanes between pooled columns hit zero rows of the Toeplitz weights; rows
    # straddling sample blocks are garbage and never read by pool2.
    acc = jnp.dot(p1_ref[0:rows2, :], w2_ref[0], preferred_element_type=f32)
    for ki in range(1, k):
        acc = acc + jnp.dot(p1_ref[ki:ki + rows2, :], w2_ref[ki],
                            preferred_element_type=f32)
    c2_ref[...] = acc + b2_ref[...]

    # ---- maxpool 2x2/2 + relu on conv2 -> lane-dense (tb, ph2*p2w) p2 --------
    for hh in range(ph2):
        rmax = jnp.maximum(c2_ref[pl.ds(2 * hh, tb, stride=ph1p), :],
                           c2_ref[pl.ds(2 * hh + 1, tb, stride=ph1p), :])
        cmax = jnp.maximum(rmax[:, :(ow2 - 1) * c2], rmax[:, c2:])
        p2_ref[:, hh * p2w:(hh + 1) * p2w] = jnp.maximum(cmax, 0.0).astype(bf16)

    # ---- fc1 (NCHW flatten folded into weights) + relu, fc2 + relu, fc3 ------
    h1 = jnp.maximum(jnp.dot(p2_ref[...], fc1w_ref[...],
                             preferred_element_type=f32) + fc1b_ref[...], 0.0)
    h2 = jnp.maximum(jnp.dot(h1.astype(bf16), fc2w_ref[...],
                             preferred_element_type=f32) + fc2b_ref[...], 0.0)
    out_ref[...] = (jnp.dot(h2.astype(bf16), fc3w_ref[...],
                            preferred_element_type=f32)
                    + fc3b_ref[...]).astype(out_ref.dtype)


# ------------------------------ derived dims ---------------------------------

def _dims(cfg):
    h, w, cin = cfg['shape']
    k = cfg['kern_size']
    c1 = cfg['out_channels']
    c2 = 2 * c1
    oh1, ow1 = h - k + 1, w - k + 1
    ph1, pw1 = oh1 // 2, ow1 // 2
    oh2, ow2 = ph1 - k + 1, pw1 - k + 1
    ph2, pw2 = oh2 // 2, ow2 // 2
    ph1p = ((ph1 + 7) // 8) * 8                   # pool1 rows padded to 8-sublane blocks
    p2w = (ow2 - 1) * c2                          # pool2 lane width per pooled row
    out_lanes = max(128, ((cfg['class_num'] + 127) // 128) * 128)
    return dict(h=h, w=w, cin=cin, k=k, c1=c1, c2=c2, oh1=oh1, ow1=ow1,
                ph1=ph1, pw1=pw1, oh2=oh2, ow2=ow2, ph2=ph2, pw2=pw2,
                ph1p=ph1p, p2w=p2w, out_lanes=out_lanes)


# --------------------------- weight packing (init-time) ----------------------

def pack_params(p, cfg):
    d = _dims(cfg)
    h, w, cin, k = d['h'], d['w'], d['cin'], d['k']
    c1, c2 = d['c1'], d['c2']
    ow1, ow2, ph2, pw2, p2w = d['ow1'], d['ow2'], d['ph2'], d['pw2'], d['p2w']
    cls, out_lanes = cfg['class_num'], d['out_lanes']
    bf16 = jnp.bfloat16

    # conv1: single (k*W*Cin, OW1*C1) matrix; vertical shift ki lives in lane block ki
    # of the wrapper's im2col input.
    wc1 = np.asarray(p['conv1_w'], np.float32)
    w1 = np.zeros((k * w * cin, ow1 * c1), np.float32)
    for ki in range(k):
        for ow_ in range(ow1):
            for kj in range(k):
                r0 = ki * w * cin + (ow_ + kj) * cin
                w1[r0:r0 + cin, ow_ * c1:(ow_ + 1) * c1] = wc1[ki, kj]

    # conv2: per-ki Toeplitz over pool1's sparse lane layout (pooled column pw lives at
    # lanes 2*pw*c1 + ci; in-between junk lanes -> zero rows).
    wc2 = np.asarray(p['conv2_w'], np.float32)
    p1_lanes = (ow1 - 1) * c1
    w2 = np.zeros((k, p1_lanes, ow2 * c2), np.float32)
    for ki in range(k):
        for ow_ in range(ow2):
            for kj in range(k):
                r0 = (ow_ + kj) * 2 * c1
                w2[ki, r0:r0 + c1, ow_ * c2:(ow_ + 1) * c2] = wc2[ki, kj]

    # fc1: fold the PyTorch NCHW flatten + pool2's lane-dense layout into one matrix.
    fw1 = np.asarray(p['fc1_w'], np.float32)                      # (c2*ph2*pw2, nout)
    fc1 = np.zeros((ph2 * p2w, fw1.shape[1]), np.float32)
    for hh in range(ph2):
        for ww in range(pw2):
            for cc in range(c2):
                fc1[hh * p2w + ww * 2 * c2 + cc, :] = fw1[cc * ph2 * pw2 + hh * pw2 + ww, :]

    # fc3: pad output lanes to a multiple of 128 so the final store is lane-dense.
    fw3 = np.asarray(p['fc3_w'], np.float32)
    fc3 = np.zeros((fw3.shape[0], out_lanes), np.float32)
    fc3[:, :cls] = fw3
    fb3 = np.zeros((1, out_lanes), np.float32)
    fb3[0, :cls] = np.asarray(p['fc3_b'], np.float32)

    return {
        'w1': jnp.asarray(w1, dtype=bf16),
        'b1': jnp.asarray(np.tile(np.asarray(p['conv1_b'], np.float32), ow1))[None, :],
        'w2': jnp.asarray(w2, dtype=bf16),
        'b2': jnp.asarray(np.tile(np.asarray(p['conv2_b'], np.float32), ow2))[None, :],
        'fc1w': jnp.asarray(fc1, dtype=bf16),
        'fc1b': jnp.asarray(p['fc1_b'], jnp.float32)[None, :],
        'fc2w': jnp.asarray(p['fc2_w'], dtype=bf16),
        'fc2b': jnp.asarray(p['fc2_b'], jnp.float32)[None, :],
        'fc3w': jnp.asarray(fc3, dtype=bf16),
        'fc3b': jnp.asarray(fb3),
    }


# ------------------------------- forward wrapper -----------------------------

def net_forward(packed, x_nchw, *, cfg, samples_per_step=8):
    d = _dims(cfg)
    h, w, cin, k = d['h'], d['w'], d['cin'], d['k']
    c1, c2 = d['c1'], d['c2']
    ow1, ow2, ph2, p2w, ph1p = d['ow1'], d['ow2'], d['ph2'], d['p2w'], d['ph1p']
    cls, out_lanes = cfg['class_num'], d['out_lanes']

    assert cfg['pool_size'] == 2   # TODO(synk): generalize beyond 2x2/stride-2 pooling
    # batch-wide pool1 stride-2 trick needs a sample's conv1 rows == 2 * padded pool rows
    assert 2 * ph1p == h           # TODO(synk): per-sample pooling fallback otherwise

    n = x_nchw.shape[0]
    tb = samples_per_step if n >= samples_per_step else n
    npad = -(-n // tb) * tb

    # NCHW -> (N, H, W*Cin); pad the batch to a multiple of the batch tile.
    xr = jnp.transpose(x_nchw, (0, 2, 3, 1)).reshape(n, h, w * cin)
    if npad > n:
        xr = jnp.pad(xr, ((0, npad - n), (0, 0), (0, 0)))
    # Fold the k vertical kernel shifts into lanes (im2col): LHS row j holds image rows
    # j..j+k-1, so conv1 becomes a single K = k*W*Cin matmul inside the kernel.
    x3 = jnp.concatenate(
        [jnp.pad(xr[:, ki:, :], ((0, 0), (0, ki), (0, 0))) for ki in range(k)],
        axis=-1).reshape(npad * h, k * w * cin).astype(jnp.bfloat16)

    kern = functools.partial(
        _fused_net_kernel, tb=tb, k=k, ow1=ow1, c1=c1, ph1p=ph1p,
        ow2=ow2, c2=c2, ph2=ph2, p2w=p2w)

    def full_spec(a):
        return pl.BlockSpec(a.shape, lambda i: (0,) * a.ndim)

    out = pl.pallas_call(
        kern,
        grid=(npad // tb,),
        out_shape=jax.ShapeDtypeStruct((npad, out_lanes), jnp.float32),
        in_specs=[pl.BlockSpec((tb * h, k * w * cin), lambda i: (i, 0)),
                  full_spec(packed['w1']), full_spec(packed['b1']),
                  full_spec(packed['w2']), full_spec(packed['b2']),
                  full_spec(packed['fc1w']), full_spec(packed['fc1b']),
                  full_spec(packed['fc2w']), full_spec(packed['fc2b']),
                  full_spec(packed['fc3w']), full_spec(packed['fc3b'])],
        out_specs=pl.BlockSpec((tb, out_lanes), lambda i: (i, 0)),
        scratch_shapes=[
            pltpu.VMEM((tb * h, ow1 * c1), jnp.float32),                 # conv1 + bias
            pltpu.VMEM((tb * ph1p + 8, (ow1 - 1) * c1), jnp.bfloat16),   # pool1 (+pad rows)
            pltpu.VMEM((tb * ph1p, ow2 * c2), jnp.float32),              # conv2 + bias
            pltpu.VMEM((tb, ph2 * p2w), jnp.bfloat16),                   # pool2, lane-dense
        ],
        compiler_params=pltpu.CompilerParams(
            dimension_semantics=("parallel",)),
    )(x3, packed['w1'], packed['b1'], packed['w2'], packed['b2'],
      packed['fc1w'], packed['fc1b'], packed['fc2w'], packed['fc2b'],
      packed['fc3w'], packed['fc3b'])
    return out[:n, :cls]


# ------------------------------ init / reference -----------------------------

def getsizeafterconv(imsize, filtsize, poolsize, filtstride=1, poolstride=2):
    return int(((imsize - filtsize) / filtstride + 1 - poolsize) / poolstride + 1)


def init_net_params(key, cfg):
    h, w, cin = cfg['shape']
    co = cfg['out_channels']
    k = cfg['kern_size']
    ps = cfg['pool_size']
    cls = cfg['class_num']
    ls0 = getsizeafterconv(getsizeafterconv(h, k, ps), k, ps)
    ls1 = getsizeafterconv(getsizeafterconv(w, k, ps), k, ps)
    fc1_in = ls0 * ls1 * co * 2

    keys = jax.random.split(key, 10)

    def uni(kk, shape, fan_in):
        bound = 1.0 / float(np.sqrt(fan_in))
        return jax.random.uniform(kk, shape, jnp.float32, -bound, bound)

    return {
        # conv weights stored (K, K, Cin, Cout); PyTorch stores (Cout, Cin, K, K)
        'conv1_w': uni(keys[0], (k, k, cin, co), cin * k * k),
        'conv1_b': uni(keys[1], (co,), cin * k * k),
        'conv2_w': uni(keys[2], (k, k, co, 2 * co), co * k * k),
        'conv2_b': uni(keys[3], (2 * co,), co * k * k),
        # linear weights stored (in, out); PyTorch stores (out, in)
        'fc1_w': uni(keys[4], (fc1_in, 4 * co), fc1_in),
        'fc1_b': uni(keys[5], (4 * co,), fc1_in),
        'fc2_w': uni(keys[6], (4 * co, 3 * co), 4 * co),
        'fc2_b': uni(keys[7], (3 * co,), 4 * co),
        'fc3_w': uni(keys[8], (3 * co, cls), 3 * co),
        'fc3_b': uni(keys[9], (cls,), 3 * co),
    }


def net_reference(p, x_nchw):
    """Plain-JAX f32 reference of the PyTorch forward (correctness check)."""
    hp = jax.lax.Precision.HIGHEST
    x = jnp.transpose(x_nchw, (0, 2, 3, 1)).astype(jnp.float32)

    def conv(v, wgt, bias):
        return jax.lax.conv_general_dilated(
            v, wgt, window_strides=(1, 1), padding='VALID',
            dimension_numbers=('NHWC', 'HWIO', 'NHWC'), precision=hp) + bias

    def pool_relu(v):
        n_, hh, ww, cc = v.shape
        v = v[:, :(hh // 2) * 2, :(ww // 2) * 2, :]
        v = v.reshape(n_, hh // 2, 2, ww // 2, 2, cc).max(axis=(2, 4))
        return jnp.maximum(v, 0.0)

    s = pool_relu(conv(x, p['conv1_w'], p['conv1_b']))
    s = pool_relu(conv(s, p['conv2_w'], p['conv2_b']))
    n_ = s.shape[0]
    s = jnp.transpose(s, (0, 3, 1, 2)).reshape(n_, -1)        # PyTorch NCHW flatten
    s = jnp.maximum(jnp.dot(s, p['fc1_w'], precision=hp) + p['fc1_b'], 0.0)
    s = jnp.maximum(jnp.dot(s, p['fc2_w'], precision=hp) + p['fc2_b'], 0.0)
    return jnp.dot(s, p['fc3_w'], precision=hp) + p['fc3_b']


# ------------------------------------ main ------------------------------------

if __name__ == "__main__":
    cfg = {
        'shape': (16, 16, 4),     # (H, W, C) as the module indexes it
        'out_channels': 8,
        'pool_size': 2,
        'class_num': 10,
        'kern_size': 3,
        'batch_norm': False,      # unused by forward()
    }
    batch = 2

    key = jax.random.PRNGKey(0)
    k_param, k_in, k_in2 = jax.random.split(key, 3)
    params = init_net_params(k_param, cfg)
    packed = pack_params(params, cfg)

    x = jax.random.normal(
        k_in, (batch, cfg['shape'][2], cfg['shape'][0], cfg['shape'][1]),
        dtype=jnp.float32)

    fwd = jax.jit(functools.partial(net_forward, cfg=cfg))
    out = jax.block_until_ready(fwd(packed, x))
    assert out.shape == (batch, cfg['class_num'])

    ref = jax.block_until_ready(net_reference(params, x))
    if not bool(jnp.allclose(out, ref, rtol=3e-2, atol=3e-2)):
        raise AssertionError(
            "fused Pallas Net output mismatch vs reference (batch=2); max abs err = "
            f"{float(jnp.max(jnp.abs(out - ref)))}")

    # Also exercise the multi-step batch grid + batch-padding path (grid of 2 steps).
    x_big = jax.random.normal(
        k_in2, (10, cfg['shape'][2], cfg['shape'][0], cfg['shape'][1]),
        dtype=jnp.float32)
    out_big = jax.block_until_ready(fwd(packed, x_big))
    ref_big = jax.block_until_ready(net_reference(params, x_big))
    if not bool(jnp.allclose(out_big, ref_big, rtol=3e-2, atol=3e-2)):
        raise AssertionError(
            "fused Pallas Net output mismatch vs reference (batch=10); max abs err = "
            f"{float(jnp.max(jnp.abs(out_big - ref_big)))}")

    print("KERNEL_OK")
</pallas_src>

<mosaic_0001>
module attributes {stable_mosaic.version = 11 : i64} {
  func.func @_fused_net_kernel(%arg0: i32, %arg1: memref<32x192xbf16, #tpu.memory_space<vmem>>, %arg2: memref<192x112xbf16, #tpu.memory_space<vmem>>, %arg3: memref<1x112xf32, #tpu.memory_space<vmem>>, %arg4: memref<3x104x80xbf16, #tpu.memory_space<vmem>>, %arg5: memref<1x80xf32, #tpu.memory_space<vmem>>, %arg6: memref<128x32xbf16, #tpu.memory_space<vmem>>, %arg7: memref<1x32xf32, #tpu.memory_space<vmem>>, %arg8: memref<32x24xbf16, #tpu.memory_space<vmem>>, %arg9: memref<1x24xf32, #tpu.memory_space<vmem>>, %arg10: memref<24x128xbf16, #tpu.memory_space<vmem>>, %arg11: memref<1x128xf32, #tpu.memory_space<vmem>>, %arg12: memref<2x128xf32, #tpu.memory_space<vmem>>, %arg13: memref<32x112xf32, #tpu.memory_space<vmem>>, %arg14: memref<24x104xbf16, #tpu.memory_space<vmem>>, %arg15: memref<16x80xf32, #tpu.memory_space<vmem>>, %arg16: memref<2x128xbf16, #tpu.memory_space<vmem>>) attributes {dimension_semantics = [#tpu.dimension_semantics<parallel>], iteration_bounds = array<i64: 1>, scalar_prefetch = 0 : i64, scratch_operands = 4 : i64, tpu.core_type = #tpu.core_type<tc>, window_params = [{transform_indices = @transform_0, window_bounds = array<i64: 32, 192>}, {pipeline_mode = #tpu.pipeline_mode<synchronous>, transform_indices = @transform_1, window_bounds = array<i64: 192, 112>}, {pipeline_mode = #tpu.pipeline_mode<synchronous>, transform_indices = @transform_2, window_bounds = array<i64: 1, 112>}, {pipeline_mode = #tpu.pipeline_mode<synchronous>, transform_indices = @transform_3, window_bounds = array<i64: 3, 104, 80>}, {pipeline_mode = #tpu.pipeline_mode<synchronous>, transform_indices = @transform_4, window_bounds = array<i64: 1, 80>}, {pipeline_mode = #tpu.pipeline_mode<synchronous>, transform_indices = @transform_5, window_bounds = array<i64: 128, 32>}, {pipeline_mode = #tpu.pipeline_mode<synchronous>, transform_indices = @transform_6, window_bounds = array<i64: 1, 32>}, {pipeline_mode = #tpu.pipeline_mode<synchronous>, transform_indices = @transform_7, window_bounds = array<i64: 32, 24>}, {pipeline_mode = #tpu.pipeline_mode<synchronous>, transform_indices = @transform_8, window_bounds = array<i64: 1, 24>}, {pipeline_mode = #tpu.pipeline_mode<synchronous>, transform_indices = @transform_9, window_bounds = array<i64: 24, 128>}, {pipeline_mode = #tpu.pipeline_mode<synchronous>, transform_indices = @transform_10, window_bounds = array<i64: 1, 128>}, {transform_indices = @transform_11, window_bounds = array<i64: 2, 128>}]} {
    %c0 = arith.constant 0 : index
    %c0_0 = arith.constant 0 : index
    %0 = vector.load %arg1[%c0, %c0_0] : memref<32x192xbf16, #tpu.memory_space<vmem>>, vector<32x192xbf16>
    %c0_1 = arith.constant 0 : index
    %c0_2 = arith.constant 0 : index
    %1 = vector.load %arg2[%c0_1, %c0_2] : memref<192x112xbf16, #tpu.memory_space<vmem>>, vector<192x112xbf16>
    %cst = arith.constant dense<0.000000e+00> : vector<32x112xf32>
    %2 = tpu.matmul %0, %1, %cst {dimension_numbers = #tpu.dot_dimension_numbers<[1], [0], [0], [1], [0, 0, 1, 1], [], []>} : vector<32x192xbf16>, vector<192x112xbf16>, vector<32x112xf32> -> vector<32x112xf32>
    %c0_3 = arith.constant 0 : index
    %c0_4 = arith.constant 0 : index
    %3 = vector.load %arg3[%c0_3, %c0_4] : memref<1x112xf32, #tpu.memory_space<vmem>>, vector<1x112xf32>
    %4 = vector.broadcast %3 : vector<1x112xf32> to vector<32x112xf32>
    %5 = arith.addf %2, %4 : vector<32x112xf32>
    %c0_5 = arith.constant 0 : index
    %c0_6 = arith.constant 0 : index
    %6 = vector.load %arg13[%c0_5, %c0_6] : memref<32x112xf32, #tpu.memory_space<vmem>>, vector<32x112xf32>
    tpu.vector_store %arg13[%c0_5, %c0_6], %5 {strides = array<i32>} : memref<32x112xf32, #tpu.memory_space<vmem>>, vector<32x112xf32>,
    %c0_7 = arith.constant 0 : index
    %c0_8 = arith.constant 0 : index
    %7 = tpu.strided_load %arg13[%c0_7, %c0_8] {strides = array<i32: 2, 1>} : memref<32x112xf32, #tpu.memory_space<vmem>>, vector<16x112xf32>
    %c1 = arith.constant 1 : index
    %c0_9 = arith.constant 0 : index
    %8 = tpu.strided_load %arg13[%c1, %c0_9] {strides = array<i32: 2, 1>} : memref<32x112xf32, #tpu.memory_space<vmem>>, vector<16x112xf32>
    %9 = arith.maximumf %7, %8 : vector<16x112xf32>
    %10 = vector.extract_strided_slice %9 {offsets = [0, 0], sizes = [16, 104], strides = [1, 1]} : vector<16x112xf32> to vector<16x104xf32>
    %11 = vector.extract_strided_slice %9 {offsets = [0, 8], sizes = [16, 104], strides = [1, 1]} : vector<16x112xf32> to vector<16x104xf32>
    %12 = arith.maximumf %10, %11 : vector<16x104xf32>
    %cst_10 = arith.constant 0.000000e+00 : f32
    %13 = vector.broadcast %cst_10 : f32 to vector<16x104xf32>
    %14 = arith.maximumf %12, %13 : vector<16x104xf32>
    %15 = arith.truncf %14 : vector<16x104xf32> to vector<16x104xbf16>
    %c0_11 = arith.constant 0 : index
    %c0_12 = arith.constant 0 : index
    %16 = vector.load %arg14[%c0_11, %c0_12] : memref<24x104xbf16, #tpu.memory_space<vmem>>, vector<16x104xbf16>
    tpu.vector_store %arg14[%c0_11, %c0_12], %15 {strides = array<i32>} : memref<24x104xbf16, #tpu.memory_space<vmem>>, vector<16x104xbf16>,
    %cst_13 = arith.constant 0.000000e+00 : bf16
    %17 = vector.broadcast %cst_13 : bf16 to vector<8x104xbf16>
    %c16 = arith.constant 16 : index
    %c0_14 = arith.constant 0 : index
    %18 = vector.load %arg14[%c16, %c0_14] : memref<24x104xbf16, #tpu.memory_space<vmem>>, vector<8x104xbf16>
    tpu.vector_store %arg14[%c16, %c0_14], %17 {strides = array<i32>} : memref<24x104xbf16, #tpu.memory_space<vmem>>, vector<8x104xbf16>,
    %c0_15 = arith.constant 0 : index
    %c0_16 = arith.constant 0 : index
    %19 = vector.load %arg14[%c0_15, %c0_16] : memref<24x104xbf16, #tpu.memory_space<vmem>>, vector<16x104xbf16>
    %c0_17 = arith.constant 0 : index
    %c0_18 = arith.constant 0 : index
    %c0_19 = arith.constant 0 : index
    %20 = vector.load %arg4[%c0_17, %c0_18, %c0_19] : memref<3x104x80xbf16, #tpu.memory_space<vmem>>, vector<1x104x80xbf16>
    %21 = vector.shape_cast %20 : vector<1x104x80xbf16> to vector<104x80xbf16>
    %cst_20 = arith.constant dense<0.000000e+00> : vector<16x80xf32>
    %22 = tpu.matmul %19, %21, %cst_20 {dimension_numbers = #tpu.dot_dimension_numbers<[1], [0], [0], [1], [0, 0, 1, 1], [], []>} : vector<16x104xbf16>, vector<104x80xbf16>, vector<16x80xf32> -> vector<16x80xf32>
    %c1_21 = arith.constant 1 : index
    %c0_22 = arith.constant 0 : index
    %23 = vector.load %arg14[%c1_21, %c0_22] : memref<24x104xbf16, #tpu.memory_space<vmem>>, vector<16x104xbf16>
    %c1_23 = arith.constant 1 : index
    %c0_24 = arith.constant 0 : index
    %c0_25 = arith.constant 0 : index
    %24 = vector.load %arg4[%c1_23, %c0_24, %c0_25] : memref<3x104x80xbf16, #tpu.memory_space<vmem>>, vector<1x104x80xbf16>
    %25 = vector.shape_cast %24 : vector<1x104x80xbf16> to vector<104x80xbf16>
    %cst_26 = arith.constant dense<0.000000e+00> : vector<16x80xf32>
    %26 = tpu.matmul %23, %25, %cst_26 {dimension_numbers = #tpu.dot_dimension_numbers<[1], [0], [0], [1], [0, 0, 1, 1], [], []>} : vector<16x104xbf16>, vector<104x80xbf16>, vector<16x80xf32> -> vector<16x80xf32>
    %27 = arith.addf %22, %26 : vector<16x80xf32>
    %c2 = arith.constant 2 : index
    %c0_27 = arith.constant 0 : index
    %28 = vector.load %arg14[%c2, %c0_27] : memref<24x104xbf16, #tpu.memory_space<vmem>>, vector<16x104xbf16>
    %c2_28 = arith.constant 2 : index
    %c0_29 = arith.constant 0 : index
    %c0_30 = arith.constant 0 : index
    %29 = vector.load %arg4[%c2_28, %c0_29, %c0_30] : memref<3x104x80xbf16, #tpu.memory_space<vmem>>, vector<1x104x80xbf16>
    %30 = vector.shape_cast %29 : vector<1x104x80xbf16> to vector<104x80xbf16>
    %cst_31 = arith.constant dense<0.000000e+00> : vector<16x80xf32>
    %31 = tpu.matmul %28, %30, %cst_31 {dimension_numbers = #tpu.dot_dimension_numbers<[1], [0], [0], [1], [0, 0, 1, 1], [], []>} : vector<16x104xbf16>, vector<104x80xbf16>, vector<16x80xf32> -> vector<16x80xf32>
    %32 = arith.addf %27, %31 : vector<16x80xf32>
    %c0_32 = arith.constant 0 : index
    %c0_33 = arith.constant 0 : index
    %33 = vector.load %arg5[%c0_32, %c0_33] : memref<1x80xf32, #tpu.memory_space<vmem>>, vector<1x80xf32>
    %34 = vector.broadcast %33 : vector<1x80xf32> to vector<16x80xf32>
    %35 = arith.addf %32, %34 : vector<16x80xf32>
    %c0_34 = arith.constant 0 : index
    %c0_35 = arith.constant 0 : index
    %36 = vector.load %arg15[%c0_34, %c0_35] : memref<16x80xf32, #tpu.memory_space<vmem>>, vector<16x80xf32>
    tpu.vector_store %arg15[%c0_34, %c0_35], %35 {strides = array<i32>} : memref<16x80xf32, #tpu.memory_space<vmem>>, vector<16x80xf32>,
    %c0_36 = arith.constant 0 : index
    %c0_37 = arith.constant 0 : index
    %37 = tpu.strided_load %arg15[%c0_36, %c0_37] {strides = array<i32: 8, 1>} : memref<16x80xf32, #tpu.memory_space<vmem>>, vector<2x80xf32>
    %c1_38 = arith.constant 1 : index
    %c0_39 = arith.constant 0 : index
    %38 = tpu.strided_load %arg15[%c1_38, %c0_39] {strides = array<i32: 8, 1>} : memref<16x80xf32, #tpu.memory_space<vmem>>, vector<2x80xf32>
    %39 = arith.maximumf %37, %38 : vector<2x80xf32>
    %40 = vector.extract_strided_slice %39 {offsets = [0, 0], sizes = [2, 64], strides = [1, 1]} : vector<2x80xf32> to vector<2x64xf32>
    %41 = vector.extract_strided_slice %39 {offsets = [0, 16], sizes = [2, 64], strides = [1, 1]} : vector<2x80xf32> to vector<2x64xf32>
    %42 = arith.maximumf %40, %41 : vector<2x64xf32>
    %cst_40 = arith.constant 0.000000e+00 : f32
    %43 = vector.broadcast %cst_40 : f32 to vector<2x64xf32>
    %44 = arith.maximumf %42, %43 : vector<2x64xf32>
    %45 = arith.truncf %44 : vector<2x64xf32> to vector<2x64xbf16>
    %c0_41 = arith.constant 0 : index
    %c0_42 = arith.constant 0 : index
    %46 = vector.load %arg16[%c0_41, %c0_42] : memref<2x128xbf16, #tpu.memory_space<vmem>>, vector<2x64xbf16>
    tpu.vector_store %arg16[%c0_41, %c0_42], %45 {strides = array<i32>} : memref<2x128xbf16, #tpu.memory_space<vmem>>, vector<2x64xbf16>,
    %c2_43 = arith.constant 2 : index
    %c0_44 = arith.constant 0 : index
    %47 = tpu.strided_load %arg15[%c2_43, %c0_44] {strides = array<i32: 8, 1>} : memref<16x80xf32, #tpu.memory_space<vmem>>, vector<2x80xf32>
    %c3 = arith.constant 3 : index
    %c0_45 = arith.constant 0 : index
    %48 = tpu.strided_load %arg15[%c3, %c0_45] {strides = array<i32: 8, 1>} : memref<16x80xf32, #tpu.memory_space<vmem>>, vector<2x80xf32>
    %49 = arith.maximumf %47, %48 : vector<2x80xf32>
    %50 = vector.extract_strided_slice %49 {offsets = [0, 0], sizes = [2, 64], strides = [1, 1]} : vector<2x80xf32> to vector<2x64xf32>
    %51 = vector.extract_strided_slice %49 {offsets = [0, 16], sizes = [2, 64], strides = [1, 1]} : vector<2x80xf32> to vector<2x64xf32>
    %52 = arith.maximumf %50, %51 : vector<2x64xf32>
    %cst_46 = arith.constant 0.000000e+00 : f32
    %53 = vector.broadcast %cst_46 : f32 to vector<2x64xf32>
    %54 = arith.maximumf %52, %53 : vector<2x64xf32>
    %55 = arith.truncf %54 : vector<2x64xf32> to vector<2x64xbf16>
    %c0_47 = arith.constant 0 : index
    %c64 = arith.constant 64 : index
    %56 = vector.load %arg16[%c0_47, %c64] : memref<2x128xbf16, #tpu.memory_space<vmem>>, vector<2x64xbf16>
    tpu.vector_store %arg16[%c0_47, %c64], %55 {strides = array<i32>} : memref<2x128xbf16, #tpu.memory_space<vmem>>, vector<2x64xbf16>,
    %c0_48 = arith.constant 0 : index
    %c0_49 = arith.constant 0 : index
    %57 = vector.load %arg16[%c0_48, %c0_49] : memref<2x128xbf16, #tpu.memory_space<vmem>>, vector<2x128xbf16>
    %c0_50 = arith.constant 0 : index
    %c0_51 = arith.constant 0 : index
    %58 = vector.load %arg6[%c0_50, %c0_51] : memref<128x32xbf16, #tpu.memory_space<vmem>>, vector<128x32xbf16>
    %cst_52 = arith.constant dense<0.000000e+00> : vector<2x32xf32>
    %59 = tpu.matmul %57, %58, %cst_52 {dimension_numbers = #tpu.dot_dimension_numbers<[1], [0], [0], [1], [0, 0, 1, 1], [], []>} : vector<2x128xbf16>, vector<128x32xbf16>, vector<2x32xf32> -> vector<2x32xf32>
    %c0_53 = arith.constant 0 : index
    %c0_54 = arith.constant 0 : index
    %60 = vector.load %arg7[%c0_53, %c0_54] : memref<1x32xf32, #tpu.memory_space<vmem>>, vector<1x32xf32>
    %61 = vector.broadcast %60 : vector<1x32xf32> to vector<2x32xf32>
    %62 = arith.addf %59, %61 : vector<2x32xf32>
    %cst_55 = arith.constant 0.000000e+00 : f32
    %63 = vector.broadcast %cst_55 : f32 to vector<2x32xf32>
    %64 = arith.maximumf %62, %63 : vector<2x32xf32>
    %65 = arith.truncf %64 : vector<2x32xf32> to vector<2x32xbf16>
    %c0_56 = arith.constant 0 : index
    %c0_57 = arith.constant 0 : index
    %66 = vector.load %arg8[%c0_56, %c0_57] : memref<32x24xbf16, #tpu.memory_space<vmem>>, vector<32x24xbf16>
    %cst_58 = arith.constant dense<0.000000e+00> : vector<2x24xf32>
    %67 = tpu.matmul %65, %66, %cst_58 {dimension_numbers = #tpu.dot_dimension_numbers<[1], [0], [0], [1], [0, 0, 1, 1], [], []>} : vector<2x32xbf16>, vector<32x24xbf16>, vector<2x24xf32> -> vector<2x24xf32>
    %c0_59 = arith.constant 0 : index
    %c0_60 = arith.constant 0 : index
    %68 = vector.load %arg9[%c0_59, %c0_60] : memref<1x24xf32, #tpu.memory_space<vmem>>, vector<1x24xf32>
    %69 = vector.broadcast %68 : vector<1x24xf32> to vector<2x24xf32>
    %70 = arith.addf %67, %69 : vector<2x24xf32>
    %cst_61 = arith.constant 0.000000e+00 : f32
    %71 = vector.broadcast %cst_61 : f32 to vector<2x24xf32>
    %72 = arith.maximumf %70, %71 : vector<2x24xf32>
    %73 = arith.truncf %72 : vector<2x24xf32> to vector<2x24xbf16>
    %c0_62 = arith.constant 0 : index
    %c0_63 = arith.constant 0 : index
    %74 = vector.load %arg10[%c0_62, %c0_63] : memref<24x128xbf16, #tpu.memory_space<vmem>>, vector<24x128xbf16>
    %cst_64 = arith.constant dense<0.000000e+00> : vector<2x128xf32>
    %75 = tpu.matmul %73, %74, %cst_64 {dimension_numbers = #tpu.dot_dimension_numbers<[1], [0], [0], [1], [0, 0, 1, 1], [], []>} : vector<2x24xbf16>, vector<24x128xbf16>, vector<2x128xf32> -> vector<2x128xf32>
    %c0_65 = arith.constant 0 : index
    %c0_66 = arith.constant 0 : index
    %76 = vector.load %arg11[%c0_65, %c0_66] : memref<1x128xf32, #tpu.memory_space<vmem>>, vector<1x128xf32>
    %77 = vector.broadcast %76 : vector<1x128xf32> to vector<2x128xf32>
    %78 = arith.addf %75, %77 : vector<2x128xf32>
    %c0_67 = arith.constant 0 : index
    %c0_68 = arith.constant 0 : index
    %79 = vector.load %arg12[%c0_67, %c0_68] : memref<2x128xf32, #tpu.memory_space<vmem>>, vector<2x128xf32>
    tpu.vector_store %arg12[%c0_67, %c0_68], %78 {strides = array<i32>} : memref<2x128xf32, #tpu.memory_space<vmem>>, vector<2x128xf32>,
    return
  }
  func.func @transform_0(%arg0: i32) -> (i32, i32) {
    %c0_i32 = arith.constant 0 : i32
    %c0_i32_0 = arith.constant 0 : i32
    return %arg0, %c0_i32 : i32, i32
  }
  func.func @transform_1(%arg0: i32) -> (i32, i32) {
    %c0_i32 = arith.constant 0 : i32
    %c0_i32_0 = arith.constant 0 : i32
    %c0_i32_1 = arith.constant 0 : i32
    return %c0_i32, %c0_i32_0 : i32, i32
  }
  func.func @transform_2(%arg0: i32) -> (i32, i32) {
    %c0_i32 = arith.constant 0 : i32
    %c0_i32_0 = arith.constant 0 : i32
    %c0_i32_1 = arith.constant 0 : i32
    return %c0_i32, %c0_i32_0 : i32, i32
  }
  func.func @transform_3(%arg0: i32) -> (i32, i32, i32) {
    %c0_i32 = arith.constant 0 : i32
    %c0_i32_0 = arith.constant 0 : i32
    %c0_i32_1 = arith.constant 0 : i32
    %c0_i32_2 = arith.constant 0 : i32
    return %c0_i32, %c0_i32_0, %c0_i32_1 : i32, i32, i32
  }
  func.func @transform_4(%arg0: i32) -> (i32, i32) {
    %c0_i32 = arith.constant 0 : i32
    %c0_i32_0 = arith.constant 0 : i32
    %c0_i32_1 = arith.constant 0 : i32
    return %c0_i32, %c0_i32_0 : i32, i32
  }
  func.func @transform_5(%arg0: i32) -> (i32, i32) {
    %c0_i32 = arith.constant 0 : i32
    %c0_i32_0 = arith.constant 0 : i32
    %c0_i32_1 = arith.constant 0 : i32
    return %c0_i32, %c0_i32_0 : i32, i32
  }
  func.func @transform_6(%arg0: i32) -> (i32, i32) {
    %c0_i32 = arith.constant 0 : i32
    %c0_i32_0 = arith.constant 0 : i32
    %c0_i32_1 = arith.constant 0 : i32
    return %c0_i32, %c0_i32_0 : i32, i32
  }
  func.func @transform_7(%arg0: i32) -> (i32, i32) {
    %c0_i32 = arith.constant 0 : i32
    %c0_i32_0 = arith.constant 0 : i32
    %c0_i32_1 = arith.constant 0 : i32
    return %c0_i32, %c0_i32_0 : i32, i32
  }
  func.func @transform_8(%arg0: i32) -> (i32, i32) {
    %c0_i32 = arith.constant 0 : i32
    %c0_i32_0 = arith.constant 0 : i32
    %c0_i32_1 = arith.constant 0 : i32
    return %c0_i32, %c0_i32_0 : i32, i32
  }
  func.func @transform_9(%arg0: i32) -> (i32, i32) {
    %c0_i32 = arith.constant 0 : i32
    %c0_i32_0 = arith.constant 0 : i32
    %c0_i32_1 = arith.constant 0 : i32
    return %c0_i32, %c0_i32_0 : i32, i32
  }
  func.func @transform_10(%arg0: i32) -> (i32, i32) {
    %c0_i32 = arith.constant 0 : i32
    %c0_i32_0 = arith.constant 0 : i32
    %c0_i32_1 = arith.constant 0 : i32
    return %c0_i32, %c0_i32_0 : i32, i32
  }
  func.func @transform_11(%arg0: i32) -> (i32, i32) {
    %c0_i32 = arith.constant 0 : i32
    %c0_i32_0 = arith.constant 0 : i32
    return %arg0, %c0_i32 : i32, i32
  }
}

</mosaic_0001>

<llo_original>
// kernel: net_forward.1
$region0: #{net_forward.1}
  #allocation0 [shape = 'u32[]', space=smem, size = 0x4, offset = 0x4, fixed_abs, tag = 'smem constant byte address 0x4 - core index']
  #allocation1 [shape = 'u32[144,128]{1,0:T(1,128)}', space=vmem, size = 0x12000, scoped, tag = 'internal scratch']
  #allocation2 [shape = 'f32[32,112]{1,0:T(8,128)}', space=vmem, size = 0x4000, scoped, tag = 'scratch operand']
  #allocation3 [shape = 'bf16[24,104]{1,0:T(8,128)(2,1)}', space=vmem, size = 0x1800, scoped, tag = 'scratch operand']
  #allocation4 [shape = 'f32[16,80]{1,0:T(8,128)}', space=vmem, size = 0x2000, scoped, tag = 'scratch operand']
  #allocation5 [shape = 'bf16[2,128]{1,0:T(2,128)(2,1)}', space=vmem, size = 0x200, scoped, tag = 'scratch operand']
  %s0 = inlined_call_operand.vmem [shape: bf16[32,192], index: 0, kind: input, shape index: {}]
  %s1 = inlined_call_operand.vmem [shape: bf16[192,112], index: 1, kind: input, shape index: {}]
  %s2 = inlined_call_operand.vmem [shape: f32[1,112], index: 2, kind: input, shape index: {}]
  %s3 = inlined_call_operand.vmem [shape: bf16[3,104,80], index: 3, kind: input, shape index: {}]
  %s4 = inlined_call_operand.vmem [shape: f32[1,80], index: 4, kind: input, shape index: {}]
  %s5 = inlined_call_operand.vmem [shape: bf16[128,32], index: 5, kind: input, shape index: {}]
  %s6 = inlined_call_operand.vmem [shape: f32[1,32], index: 6, kind: input, shape index: {}]
  %s7 = inlined_call_operand.vmem [shape: bf16[32,24], index: 7, kind: input, shape index: {}]
  %s8 = inlined_call_operand.vmem [shape: f32[1,24], index: 8, kind: input, shape index: {}]
  %s9 = inlined_call_operand.vmem [shape: bf16[24,128], index: 9, kind: input, shape index: {}]
  %s10 = inlined_call_operand.vmem [shape: f32[1,128], index: 10, kind: input, shape index: {}]
  %s11 = inlined_call_operand.hbm [shape: f32[2,128], index: 11, kind: output, shape index: {}]
  %s12 = sld [smem:[#allocation0]]
  $region54: #{net_forward.1} parent=0
    _
  %s14 = ssub.s32 1, %s12
  %s15 = scalar_select 0, %s14, %s12
  $region1: #{net_forward.1} parent=0
    #allocation6 [shape = 'u8[1024]{0}', space=vmem, size = 0x400, scoped, tag = 'output window, operand 0, single buffered']
    #allocation7 [shape = 's32[1]{0}', space=sflag, size = 0x4, scoped, tag = 'scoped memory for net_forward.1']
    %16 = vsyncpa [#allocation7], 0
    // Predicated region
    $region2: #{net_forward.1} parent=1 // pred_check
      _
    $region3: #{net_forward.1} parent=1 // pred_check_branch
      %18 = sbr.rel (0) target = $region5
    $region4: #{net_forward.1} parent=1 // pred_region
      _
    $region5: #{net_forward.1} parent=1 // pred_fallthru
      _
    // Predicated region
    $region6: #{net_forward.1} parent=1 // pred_check
      _
    $region7: #{net_forward.1} parent=1 // pred_check_branch
      %20 = sbr.rel (0) target = $region9
    $region8: #{net_forward.1} parent=1 // pred_region
      _
    $region9: #{net_forward.1} parent=1 // pred_fallthru
      _
    // Predicated region
    $region10: #{net_forward.1} parent=1 // pred_check
      _
    $region11: #{net_forward.1} parent=1 // pred_check_branch
      %22 = sbr.rel (0) target = $region13
    $region12: #{net_forward.1} parent=1 // pred_region
      _
    $region13: #{net_forward.1} parent=1 // pred_fallthru
      _
    // Predicated region
    $region14: #{net_forward.1} parent=1 // pred_check
      _
    $region15: #{net_forward.1} parent=1 // pred_check_branch
      %24 = sbr.rel (0) target = $region17
    $region16: #{net_forward.1} parent=1 // pred_region
      _
    $region17: #{net_forward.1} parent=1 // pred_fallthru
      _
    // Predicated region
    $region18: #{net_forward.1} parent=1 // pred_check
      _
    $region19: #{net_forward.1} parent=1 // pred_check_branch
      %26 = sbr.rel (0) target = $region21
    $region20: #{net_forward.1} parent=1 // pred_region
      _
    $region21: #{net_forward.1} parent=1 // pred_fallthru
      _
    // Predicated region
    $region22: #{net_forward.1} parent=1 // pred_check
      _
    $region23: #{net_forward.1} parent=1 // pred_check_branch
      %28 = sbr.rel (0) target = $region25
    $region24: #{net_forward.1} parent=1 // pred_region
      _
    $region25: #{net_forward.1} parent=1 // pred_fallthru
      _
    // Predicated region
    $region26: #{net_forward.1} parent=1 // pred_check
      _
    $region27: #{net_forward.1} parent=1 // pred_check_branch
      %30 = sbr.rel (0) target = $region29
    $region28: #{net_forward.1} parent=1 // pred_region
      _
    $region29: #{net_forward.1} parent=1 // pred_fallthru
      _
    // Predicated region
    $region30: #{net_forward.1} parent=1 // pred_check
      _
    $region31: #{net_forward.1} parent=1 // pred_check_branch
      %32 = sbr.rel (0) target = $region33
    $region32: #{net_forward.1} parent=1 // pred_region
      _
    $region33: #{net_forward.1} parent=1 // pred_fallthru
      _
    // Predicated region
    $region34: #{net_forward.1} parent=1 // pred_check
      _
    $region35: #{net_forward.1} parent=1 // pred_check_branch
      %34 = sbr.rel (0) target = $region37
    $region36: #{net_forward.1} parent=1 // pred_region
      _
    $region37: #{net_forward.1} parent=1 // pred_fallthru
      _
    // Predicated region
    $region38: #{net_forward.1} parent=1 // pred_check
      _
    $region39: #{net_forward.1} parent=1 // pred_check_branch
      %36 = sbr.rel (0) target = $region41
    $region40: #{net_forward.1} parent=1 // pred_region
      _
    $region41: #{net_forward.1} parent=1 // pred_fallthru
      _
    // Predicated region
    $region42: #{net_forward.1} parent=1 // pred_check
      _
    $region43: #{net_forward.1} parent=1 // pred_check_branch
      %38 = sbr.rel (0) target = $region45
    $region44: #{net_forward.1} parent=1 // pred_region
      _
    $region45: #{net_forward.1} parent=1 // pred_fallthru
      _
    %v40 = vld [vmem:[%s0] sm:$0xff]
    %v41 = vld [vmem:[%s0 + $0x8] sm:$0xff]
    %v42 = vld [vmem:[%s0 + $0x10] sm:$0xff]
    %v43 = vld [vmem:[%s0 + $0x18] sm:$0xff]
    %v44 = vld [vmem:[%s1] sm:$0xf]
    %v45 = vld [vmem:[%s1 + $0x4] sm:$0xf]
    %v46 = vld [vmem:[%s1 + $0x8] sm:$0xf]
    %v47 = vld [vmem:[%s1 + $0xc] sm:$0xf]
    %v48 = vld [vmem:[%s1 + $0x10] sm:$0xf]
    %v49 = vld [vmem:[%s1 + $0x14] sm:$0xf]
    %v50 = vld [vmem:[%s1 + $0x18] sm:$0xf]
    %v51 = vld [vmem:[%s1 + $0x1c] sm:$0xf]
    %v52 = vld [vmem:[%s1 + $0x20] sm:$0xf]
    %v53 = vld [vmem:[%s1 + $0x24] sm:$0xf]
    %v54 = vld [vmem:[%s1 + $0x28] sm:$0xf]
    %v55 = vld [vmem:[%s1 + $0x2c] sm:$0xf]
    %v56 = vld [vmem:[%s1 + $0x30] sm:$0xf]
    %v57 = vld [vmem:[%s1 + $0x34] sm:$0xf]
    %v58 = vld [vmem:[%s1 + $0x38] sm:$0xf]
    %v59 = vld [vmem:[%s1 + $0x3c] sm:$0xf]
    %v60 = vld [vmem:[%s1 + $0x40] sm:$0xf]
    %v61 = vld [vmem:[%s1 + $0x44] sm:$0xf]
    %v62 = vld [vmem:[%s1 + $0x48] sm:$0xf]
    %v63 = vld [vmem:[%s1 + $0x4c] sm:$0xf]
    %v64 = vld [vmem:[%s1 + $0x50] sm:$0xf]
    %v65 = vld [vmem:[%s1 + $0x54] sm:$0xf]
    %v66 = vld [vmem:[%s1 + $0x58] sm:$0xf]
    %v67 = vld [vmem:[%s1 + $0x5c] sm:$0xf]
    %v68 = vld [vmem:[%s2] sm:$0x1]
    %v70 = vlaneseq
    %v71 = vshrl.u32 %v70, 7
    %v72 = vsub.s32 0, %v71
    %v73 = vrot.slane %v68, %v72
    %v79 = vunpack.c.l.b16 %v40
    %v80 = vunpack.c.h.b16 %v40
    %v81 = vunpack.c.l.b16 %v41
    %v82 = vunpack.c.h.b16 %v41
    %v83 = vunpack.c.l.b16 %v42
    %v84 = vunpack.c.h.b16 %v42
    %v85 = vunpack.c.l.b16 %v43
    %v86 = vunpack.c.h.b16 %v43
    %v87 = vpack.c.b16 %v81, %v79
    %v88 = vpack.c.b16 %v82, %v80
    %v89 = vpack.c.b16 %v85, %v83
    %v90 = vpack.c.b16 %v86, %v84
    %v117 = vunpack.c.l.b16 %v44
    %v118 = vunpack.c.l.b16 %v45
    %v119 = vunpack.c.l.b16 %v46
    %v120 = vunpack.c.l.b16 %v47
    %v121 = vunpack.c.l.b16 %v48
    %v122 = vunpack.c.l.b16 %v49
    %v123 = vunpack.c.l.b16 %v50
    %v124 = vunpack.c.l.b16 %v51
    %v125 = vunpack.c.l.b16 %v52
    %v126 = vunpack.c.l.b16 %v53
    %v127 = vunpack.c.l.b16 %v54
    %v128 = vunpack.c.l.b16 %v55
    %v129 = vunpack.c.l.b16 %v56
    %v130 = vunpack.c.l.b16 %v57
    %v131 = vunpack.c.l.b16 %v58
    %v132 = vunpack.c.l.b16 %v59
    %v133 = vunpack.c.l.b16 %v60
    %v134 = vunpack.c.l.b16 %v61
    %v135 = vunpack.c.l.b16 %v62
    %v136 = vunpack.c.l.b16 %v63
    %v137 = vunpack.c.l.b16 %v64
    %v138 = vunpack.c.l.b16 %v65
    %v139 = vunpack.c.l.b16 %v66
    %v140 = vunpack.c.l.b16 %v67
    %v141 = vpack.c.b16 %v118, %v117
    %v142 = vpack.c.b16 %v120, %v119
    %v143 = vpack.c.b16 %v122, %v121
    %v144 = vpack.c.b16 %v124, %v123
    %v145 = vpack.c.b16 %v126, %v125
    %v146 = vpack.c.b16 %v128, %v127
    %v147 = vpack.c.b16 %v130, %v129
    %v148 = vpack.c.b16 %v132, %v131
    %v149 = vpack.c.b16 %v134, %v133
    %v150 = vpack.c.b16 %v136, %v135
    %v151 = vpack.c.b16 %v138, %v137
    %v152 = vpack.c.b16 %v140, %v139
    %vm165 = vcmask 523264
    %v167 = vsel %vm165, %v88, 0
    %v170 = vsel %vm165, %v90, 0
    %172 = vmatprep.subr.bf16.mxu0 0
    %173 = vmatpush1.bf16.msra.mxu0 %v148
    %174 = vmatprep.subr.bf16.mxu0 0
    %175 = vmatpush1.bf16.msra.mxu0 %v147
    %176 = vmatprep.subr.bf16.mxu0 0
    %177 = vmatpush1.bf16.msra.mxu0 %v146
    %178 = vmatprep.subr.bf16.mxu0 0
    %179 = vmatpush1.bf16.msra.mxu0 %v145
    %180 = vmatprep.subr.bf16.mxu0 0
    %181 = vmatpush1.bf16.msra.mxu0 %v144
    %182 = vmatprep.subr.bf16.mxu0 0
    %183 = vmatpush1.bf16.msra.mxu0 %v143
    %184 = vmatprep.subr.bf16.mxu0 0
    %185 = vmatpush1.bf16.msra.mxu0 %v142
    %186 = vmatprep.subr.bf16.mxu0 0
    %187 = vmatpush1.bf16.msra.mxu0 %v141
    %188 = vmatprep.subr.bf16.mxu0 0
    %189 = vmatpush2.bf16.msra.mxu0 0
    %190 = vmatprep.subr.bf16.mxu0 0
    %191 = vmatpush2.bf16.msra.mxu0 0
    %192 = vmatprep.subr.bf16.mxu0 0
    %193 = vmatpush2.bf16.msra.mxu0 0
    %194 = vmatprep.subr.bf16.mxu0 0
    %195 = vmatpush2.bf16.msra.mxu0 0
    %196 = vmatprep.subr.bf16.mxu0 0
    %197 = vmatpush2.bf16.msra.mxu0 %v152
    %198 = vmatprep.subr.bf16.mxu0 0
    %199 = vmatpush2.bf16.msra.mxu0 %v151
    %200 = vmatprep.subr.bf16.mxu0 0
    %201 = vmatpush2.bf16.msra.mxu0 %v150
    %202 = vmatprep.subr.bf16.mxu0 0
    %203 = vmatpush2.bf16.msra.mxu0 %v149
    %204 = vmatprep.mubr.bf16.mxu0 %v167
    %205 = vmatmul.mubr.bf16.gmra.mxu0 %v87
    %v206 = vpop.f32.mrf.mxu0
    %v207 = vadd.f32 %v73, %v206
    %v208 = vpop.f32.mrf.mxu0
    %v209 = vpop.f32.mrf.mxu0
    %v210 = vadd.f32 %v73, %v209
    %v211 = vpop.f32.mrf.mxu0
    %212 = vmatprep.mubr.bf16.mxu0 %v170
    %213 = vmatmul.mubr.bf16.gmra.mxu0 %v89
    %v214 = vpop.f32.mrf.mxu0
    %v215 = vadd.f32 %v73, %v214
    %v216 = vpop.f32.mrf.mxu0
    %v217 = vpop.f32.mrf.mxu0
    %v218 = vadd.f32 %v73, %v217
    %v219 = vpop.f32.mrf.mxu0
    %220 = vdwg.mxu0
    %vm221 = vcmask 916480
    %222 = vst.msk [vmem:[#allocation2] sm:$0xff] %vm221, %v207
    %223 = vst.msk [vmem:[#allocation2 + $0x8] sm:$0xff] %vm221, %v210
    %224 = vst.msk [vmem:[#allocation2 + $0x10] sm:$0xff] %vm221, %v215
    %225 = vst.msk [vmem:[#allocation2 + $0x18] sm:$0xff] %vm221, %v218
    %v226 = vld [vmem:[#allocation2] ss:$2 sm:$0xff]
    %s227 = scalar_lea.vmem [#allocation2], 16
    %v228 = vld [vmem:[%s227] ss:$2 sm:$0xff]
    %s229 = scalar_lea.vmem [#allocation2], 1
    %v230 = vld [vmem:[%s229] ss:$2 sm:$0xff]
    %s231 = scalar_lea.vmem [#allocation2], 17
    %v232 = vld [vmem:[%s231] ss:$2 sm:$0xff]
    %v233 = vmax.f32 %v226, %v230
    %v234 = vmax.f32 %v228, %v232
    %237 = vrot.lane.b32.xlu0 %v233, 120
    %v238 = vpop.permute.xlu0 %237
    %239 = vrot.lane.b32.xlu0 %v234, 120
    %v240 = vpop.permute.xlu0 %239
    %v243 = vmax.f32 %v233, %v238
    %v244 = vmax.f32 %v234, %v240
    %v245 = vmax.f32 %v243, 0.0
    %v246 = vmax.f32 %v244, 0.0
    %v247 = vpack.c.bf16 %v246, %v245
    %v249 = vunpack.c.l.b16 %v247
    %v250 = vunpack.c.h.b16 %v247
    %v251 = vpack.c.b16 %v249, %v249
    %v252 = vpack.c.b16 %v250, %v250
    %vm255 = vcmask 846848
    %256 = vst.msk [vmem:[#allocation3] sm:$0xf] %vm255, %v251
    %257 = vst.msk [vmem:[#allocation3 + $0x4] sm:$0xf] %vm255, %v252
    %258 = vst.msk [vmem:[#allocation3 + $0x8] sm:$0xf] %vm255, 0
    %v259 = vld [vmem:[#allocation3] sm:$0xf]
    %v260 = vld [vmem:[#allocation3 + $0x4] sm:$0xf]
    %v261 = vld [vmem:[%s3] sm:$0xf]
    %v262 = vld [vmem:[%s3 + $0x4] sm:$0xf]
    %v263 = vld [vmem:[%s3 + $0x8] sm:$0xf]
    %v264 = vld [vmem:[%s3 + $0xc] sm:$0xf]
    %v265 = vld [vmem:[%s3 + $0x10] sm:$0xf]
    %v266 = vld [vmem:[%s3 + $0x14] sm:$0xf]
    %v267 = vld [vmem:[%s3 + $0x18] sm:$0xf]
    %v268 = vld [vmem:[%s3 + $0x1c] sm:$0xf]
    %v269 = vld [vmem:[%s3 + $0x20] sm:$0xf]
    %v270 = vld [vmem:[%s3 + $0x24] sm:$0xf]
    %v271 = vld [vmem:[%s3 + $0x28] sm:$0xf]
    %v272 = vld [vmem:[%s3 + $0x2c] sm:$0xf]
    %v273 = vld [vmem:[%s3 + $0x30] sm:$0xf]
    %v274 = vld [vmem:[#allocation3 + $0x8] sm:$0x1]
    %s275 = scalar_lea.vmem %s3, 52
    %v276 = vld [vmem:[%s275] sm:$0xf]
    %v277 = vld [vmem:[%s275 + $0x4] sm:$0xf]
    %v278 = vld [vmem:[%s275 + $0x8] sm:$0xf]
    %v279 = vld [vmem:[%s275 + $0xc] sm:$0xf]
    %v280 = vld [vmem:[%s275 + $0x10] sm:$0xf]
    %v281 = vld [vmem:[%s275 + $0x14] sm:$0xf]
    %v282 = vld [vmem:[%s275 + $0x18] sm:$0xf]
    %v283 = vld [vmem:[%s275 + $0x1c] sm:$0xf]
    %v284 = vld [vmem:[%s275 + $0x20] sm:$0xf]
    %v285 = vld [vmem:[%s275 + $0x24] sm:$0xf]
    %v286 = vld [vmem:[%s275 + $0x28] sm:$0xf]
    %v287 = vld [vmem:[%s275 + $0x2c] sm:$0xf]
    %v288 = vld [vmem:[%s275 + $0x30] sm:$0xf]
    %v292 = vunpack.c.l.b16 %v259
    %v293 = vunpack.c.l.b16 %v260
    %v294 = vunpack.c.l.b16 %v274
    %v295 = vpack.c.b16 %v293, %v292
    %v296 = vpack.c.b16 %v294, %v294
    %vm297 = vsmask.f32 7424
    %v299 = vshrl.u32 %v295, 16
    %v301 = vshll.u32 %v295, 16
    %v303 = vrot.slane %v301, 1
    %v304 = vor.u32 %v299, %v303
    %v306 = vshll.u32 %v296, 16
    %v308 = vrot.slane %v306, 1
    %v309 = vsel %vm297, %v304, %v308
    %v323 = vunpack.c.l.b16 %v276
    %v324 = vunpack.c.l.b16 %v277
    %v325 = vunpack.c.l.b16 %v278
    %v326 = vunpack.c.l.b16 %v279
    %v327 = vunpack.c.l.b16 %v280
    %v328 = vunpack.c.l.b16 %v281
    %v329 = vunpack.c.l.b16 %v282
    %v330 = vunpack.c.l.b16 %v283
    %v331 = vunpack.c.l.b16 %v284
    %v332 = vunpack.c.l.b16 %v285
    %v333 = vunpack.c.l.b16 %v286
    %v334 = vunpack.c.l.b16 %v287
    %v335 = vunpack.c.l.b16 %v288
    %v336 = vpack.c.b16 %v324, %v323
    %v337 = vpack.c.b16 %v326, %v325
    %v338 = vpack.c.b16 %v328, %v327
    %v339 = vpack.c.b16 %v330, %v329
    %v340 = vpack.c.b16 %v332, %v331
    %v341 = vpack.c.b16 %v334, %v333
    %v342 = vpack.c.b16 %v335, %v335
    %vm349 = vcmask 850944
    %v351 = vsel %vm349, %v309, 0
    %vm353 = vcmask 1043456
    %v355 = vsel %vm353, %v342, 0
    %357 = vmatprep.subr.bf16.mxu0 0
    %358 = vmatpush1.bf16.msra.mxu0 0
    %359 = vmatprep.subr.bf16.mxu0 0
    %360 = vmatpush1.bf16.msra.mxu0 %v355
    %361 = vmatprep.subr.bf16.mxu0 0
    %362 = vmatpush1.bf16.msra.mxu0 %v341
    %363 = vmatprep.subr.bf16.mxu0 0
    %364 = vmatpush1.bf16.msra.mxu0 %v340
    %365 = vmatprep.subr.bf16.mxu0 0
    %366 = vmatpush1.bf16.msra.mxu0 %v339
    %367 = vmatprep.subr.bf16.mxu0 0
    %368 = vmatpush1.bf16.msra.mxu0 %v338
    %369 = vmatprep.subr.bf16.mxu0 0
    %370 = vmatpush1.bf16.msra.mxu0 %v337
    %371 = vmatprep.subr.bf16.mxu0 0
    %372 = vmatpush1.bf16.msra.mxu0 %v336
    %373 = vmatprep.subr.bf16.mxu0 0
    %374 = vmatpush2.bf16.msra.mxu0 0
    %375 = vmatprep.subr.bf16.mxu0 0
    %376 = vmatpush2.bf16.msra.mxu0 0
    %377 = vmatprep.subr.bf16.mxu0 0
    %378 = vmatpush2.bf16.msra.mxu0 0
    %379 = vmatprep.subr.bf16.mxu0 0
    %380 = vmatpush2.bf16.msra.mxu0 0
    %381 = vmatprep.subr.bf16.mxu0 0
    %382 = vmatpush2.bf16.msra.mxu0 0
    %383 = vmatprep.subr.bf16.mxu0 0
    %384 = vmatpush2.bf16.msra.mxu0 0
    %385 = vmatprep.subr.bf16.mxu0 0
    %386 = vmatpush2.bf16.msra.mxu0 0
    %387 = vmatprep.subr.bf16.mxu0 0
    %388 = vmatpush2.bf16.msra.mxu0 0
    %389 = vmatprep.mubr.bf16.mxu0 0
    %390 = vmatmul.mubr.bf16.gmra.mxu0 %v351
    %v391 = vpop.f32.mrf.mxu0
    %v392 = vadd.f32 0.0, %v391
    %v393 = vpop.f32.mrf.mxu0
    %v394 = vpop.f32.mrf.mxu0
    %v395 = vadd.f32 0.0, %v394
    %v396 = vpop.f32.mrf.mxu0
    %397 = vdwg.mxu0
    %v411 = vunpack.c.l.b16 %v261
    %v412 = vunpack.c.l.b16 %v262
    %v413 = vunpack.c.l.b16 %v263
    %v414 = vunpack.c.l.b16 %v264
    %v415 = vunpack.c.l.b16 %v265
    %v416 = vunpack.c.l.b16 %v266
    %v417 = vunpack.c.l.b16 %v267
    %v418 = vunpack.c.l.b16 %v268
    %v419 = vunpack.c.l.b16 %v269
    %v420 = vunpack.c.l.b16 %v270
    %v421 = vunpack.c.l.b16 %v271
    %v422 = vunpack.c.l.b16 %v272
    %v423 = vunpack.c.l.b16 %v273
    %v424 = vpack.c.b16 %v412, %v411
    %v425 = vpack.c.b16 %v414, %v413
    %v426 = vpack.c.b16 %v416, %v415
    %v427 = vpack.c.b16 %v418, %v417
    %v428 = vpack.c.b16 %v420, %v419
    %v429 = vpack.c.b16 %v422, %v421
    %v430 = vpack.c.b16 %v423, %v423
    %v437 = vsel %vm349, %v295, 0
    %v440 = vsel %vm353, %v430, 0
    %442 = vmatprep.subr.bf16.mxu0 0
    %443 = vmatpush1.bf16.msra.mxu0 0
    %444 = vmatprep.subr.bf16.mxu0 0
    %445 = vmatpush1.bf16.msra.mxu0 %v440
    %446 = vmatprep.subr.bf16.mxu0 0
    %447 = vmatpush1.bf16.msra.mxu0 %v429
    %448 = vmatprep.subr.bf16.mxu0 0
    %449 = vmatpush1.bf16.msra.mxu0 %v428
    %450 = vmatprep.subr.bf16.mxu0 0
    %451 = vmatpush1.bf16.msra.mxu0 %v427
    %452 = vmatprep.subr.bf16.mxu0 0
    %453 = vmatpush1.bf16.msra.mxu0 %v426
    %454 = vmatprep.subr.bf16.mxu0 0
    %455 = vmatpush1.bf16.msra.mxu0 %v425
    %456 = vmatprep.subr.bf16.mxu0 0
    %457 = vmatpush1.bf16.msra.mxu0 %v424
    %458 = vmatprep.subr.bf16.mxu0 0
    %459 = vmatpush2.bf16.msra.mxu0 0
    %460 = vmatprep.subr.bf16.mxu0 0
    %461 = vmatpush2.bf16.msra.mxu0 0
    %462 = vmatprep.subr.bf16.mxu0 0
    %463 = vmatpush2.bf16.msra.mxu0 0
    %464 = vmatprep.subr.bf16.mxu0 0
    %465 = vmatpush2.bf16.msra.mxu0 0
    %466 = vmatprep.subr.bf16.mxu0 0
    %467 = vmatpush2.bf16.msra.mxu0 0
    %468 = vmatprep.subr.bf16.mxu0 0
    %469 = vmatpush2.bf16.msra.mxu0 0
    %470 = vmatprep.subr.bf16.mxu0 0
    %471 = vmatpush2.bf16.msra.mxu0 0
    %472 = vmatprep.subr.bf16.mxu0 0
    %473 = vmatpush2.bf16.msra.mxu0 0
    %474 = vmatprep.mubr.bf16.mxu0 0
    %475 = vmatmul.mubr.bf16.gmra.mxu0 %v437
    %v476 = vpop.f32.mrf.mxu0
    %v477 = vadd.f32 %v392, %v476
    %v478 = vpop.f32.mrf.mxu0
    %v479 = vpop.f32.mrf.mxu0
    %v480 = vadd.f32 %v395, %v479
    %v481 = vpop.f32.mrf.mxu0
    %482 = vdwg.mxu0
    %v483 = vld [vmem:[#allocation3] sm:$0xe]
    %s484 = scalar_lea.vmem %s3, 104
    %v485 = vld [vmem:[%s484] sm:$0xf]
    %v486 = vld [vmem:[%s484 + $0x4] sm:$0xf]
    %v487 = vld [vmem:[%s484 + $0x8] sm:$0xf]
    %v488 = vld [vmem:[%s484 + $0xc] sm:$0xf]
    %v489 = vld [vmem:[%s484 + $0x10] sm:$0xf]
    %v490 = vld [vmem:[%s484 + $0x14] sm:$0xf]
    %v491 = vld [vmem:[%s484 + $0x18] sm:$0xf]
    %v492 = vld [vmem:[%s484 + $0x1c] sm:$0xf]
    %v493 = vld [vmem:[%s484 + $0x20] sm:$0xf]
    %v494 = vld [vmem:[%s484 + $0x24] sm:$0xf]
    %v495 = vld [vmem:[%s484 + $0x28] sm:$0xf]
    %v496 = vld [vmem:[%s484 + $0x2c] sm:$0xf]
    %v497 = vld [vmem:[%s484 + $0x30] sm:$0xf]
    %v499 = vunpack.c.l.b16 %v483
    %v500 = vpack.c.b16 %v293, %v499
    %vm501 = vcmask 1046528
    %v502 = vrot.slane %v500, 1
    %v503 = vrot.slane %v296, 1
    %v504 = vsel %vm501, %v502, %v503
    %v518 = vunpack.c.l.b16 %v485
    %v519 = vunpack.c.l.b16 %v486
    %v520 = vunpack.c.l.b16 %v487
    %v521 = vunpack.c.l.b16 %v488
    %v522 = vunpack.c.l.b16 %v489
    %v523 = vunpack.c.l.b16 %v490
    %v524 = vunpack.c.l.b16 %v491
    %v525 = vunpack.c.l.b16 %v492
    %v526 = vunpack.c.l.b16 %v493
    %v527 = vunpack.c.l.b16 %v494
    %v528 = vunpack.c.l.b16 %v495
    %v529 = vunpack.c.l.b16 %v496
    %v530 = vunpack.c.l.b16 %v497
    %v531 = vpack.c.b16 %v519, %v518
    %v532 = vpack.c.b16 %v521, %v520
    %v533 = vpack.c.b16 %v523, %v522
    %v534 = vpack.c.b16 %v525, %v524
    %v535 = vpack.c.b16 %v527, %v526
    %v536 = vpack.c.b16 %v529, %v528
    %v537 = vpack.c.b16 %v530, %v530
    %v545 = vsel %vm349, %v504, 0
    %v548 = vsel %vm353, %v537, 0
    %550 = vmatprep.subr.bf16.mxu0 0
    %551 = vmatpush1.bf16.msra.mxu0 0
    %552 = vmatprep.subr.bf16.mxu0 0
    %553 = vmatpush1.bf16.msra.mxu0 %v548
    %554 = vmatprep.subr.bf16.mxu0 0
    %555 = vmatpush1.bf16.msra.mxu0 %v536
    %556 = vmatprep.subr.bf16.mxu0 0
    %557 = vmatpush1.bf16.msra.mxu0 %v535
    %558 = vmatprep.subr.bf16.mxu0 0
    %559 = vmatpush1.bf16.msra.mxu0 %v534
    %560 = vmatprep.subr.bf16.mxu0 0
    %561 = vmatpush1.bf16.msra.mxu0 %v533
    %562 = vmatprep.subr.bf16.mxu0 0
    %563 = vmatpush1.bf16.msra.mxu0 %v532
    %564 = vmatprep.subr.bf16.mxu0 0
    %565 = vmatpush1.bf16.msra.mxu0 %v531
    %566 = vmatprep.subr.bf16.mxu0 0
    %567 = vmatpush2.bf16.msra.mxu0 0
    %568 = vmatprep.subr.bf16.mxu0 0
    %569 = vmatpush2.bf16.msra.mxu0 0
    %570 = vmatprep.subr.bf16.mxu0 0
    %571 = vmatpush2.bf16.msra.mxu0 0
    %572 = vmatprep.subr.bf16.mxu0 0
    %573 = vmatpush2.bf16.msra.mxu0 0
    %574 = vmatprep.subr.bf16.mxu0 0
    %575 = vmatpush2.bf16.msra.mxu0 0
    %576 = vmatprep.subr.bf16.mxu0 0
    %577 = vmatpush2.bf16.msra.mxu0 0
    %578 = vmatprep.subr.bf16.mxu0 0
    %579 = vmatpush2.bf16.msra.mxu0 0
    %580 = vmatprep.subr.bf16.mxu0 0
    %581 = vmatpush2.bf16.msra.mxu0 0
    %582 = vmatprep.mubr.bf16.mxu0 0
    %583 = vmatmul.mubr.bf16.gmra.mxu0 %v545
    %v584 = vpop.f32.mrf.mxu0
    %v585 = vadd.f32 0.0, %v584
    %v586 = vpop.f32.mrf.mxu0
    %v587 = vpop.f32.mrf.mxu0
    %v588 = vadd.f32 0.0, %v587
    %v589 = vpop.f32.mrf.mxu0
    %590 = vdwg.mxu0
    %v591 = vadd.f32 %v477, %v585
    %v592 = vadd.f32 %v480, %v588
    %v593 = vld [vmem:[%s4] sm:$0x1]
    %v595 = vlaneseq
    %v596 = vshrl.u32 %v595, 7
    %v597 = vsub.s32 0, %v596
    %v598 = vrot.slane %v593, %v597
    %v600 = vadd.f32 %v591, %v598
    %v601 = vadd.f32 %v592, %v598
    %vm602 = vcmask 654336
    %603 = vst.msk [vmem:[#allocation4] sm:$0xff] %vm602, %v600
    %604 = vst.msk [vmem:[#allocation4 + $0x8] sm:$0xff] %vm602, %v601
    %v605 = vld [vmem:[#allocation4] ss:$8 sm:$0x3]
    %s606 = scalar_lea.vmem [#allocation4], 1
    %v607 = vld [vmem:[%s606] ss:$8 sm:$0x3]
    %v608 = vmax.f32 %v605, %v607
    %610 = vrot.lane.b32.xlu0 %v608, 112
    %v611 = vpop.permute.xlu0 %610
    %v613 = vmax.f32 %v608, %v611
    %v614 = vmax.f32 %v613, 0.0
    %v615 = vpack.c.bf16 %v614, %v614
    %vm616 = vcmask 516096
    %617 = vst.msk [vmem:[#allocation5] sm:$0x1] %vm616, %v615
    %s618 = scalar_lea.vmem [#allocation4], 2
    %v619 = vld [vmem:[%s618] ss:$8 sm:$0x3]
    %s620 = scalar_lea.vmem [#allocation4], 3
    %v621 = vld [vmem:[%s620] ss:$8 sm:$0x3]
    %v622 = vmax.f32 %v619, %v621
    %624 = vrot.lane.b32.xlu0 %v622, 112
    %v625 = vpop.permute.xlu0 %624
    %v627 = vmax.f32 %v622, %v625
    %v628 = vmax.f32 %v627, 0.0
    %v629 = vpack.c.bf16 %v628, %v628
    %v632 = vunpack.c.l.s4 1966171168
    %v633 = vunpack.c.0.s8 %v632
    %v634 = vlaneseq
    %v635 = vshrl.u32 %v634, 7
    %v636 = vsub.s32 %v633, %v635
    %v637 = vrot.slane %v629, %v636
    %v639 = vunpack.c.l.s4 1966171168
    %v640 = vunpack.c.0.s8 %v639
    %v641 = vlaneseq
    %v642 = vshrl.u32 %v641, 7
    %v643 = vsub.s32 %v640, %v642
    %v644 = vrot.slane %v637, %v643
    %645 = vrot.lane.b32.xlu0 %v644, 64
    %v646 = vpop.permute.xlu0 %645
    %vm648 = vcmask 1040896
    %649 = vst.msk [vmem:[#allocation5] sm:$0x1] %vm648, %v646
    %v650 = vld [vmem:[#allocation5] sm:$0x1]
    %v651 = vld [vmem:[%s5] sm:$0xf]
    %v652 = vld [vmem:[%s5 + $0x4] sm:$0xf]
    %v653 = vld [vmem:[%s5 + $0x8] sm:$0xf]
    %v654 = vld [vmem:[%s5 + $0xc] sm:$0xf]
    %v655 = vld [vmem:[%s5 + $0x10] sm:$0xf]
    %v656 = vld [vmem:[%s5 + $0x14] sm:$0xf]
    %v657 = vld [vmem:[%s5 + $0x18] sm:$0xf]
    %v658 = vld [vmem:[%s5 + $0x1c] sm:$0xf]
    %v659 = vld [vmem:[%s5 + $0x20] sm:$0xf]
    %v660 = vld [vmem:[%s5 + $0x24] sm:$0xf]
    %v661 = vld [vmem:[%s5 + $0x28] sm:$0xf]
    %v662 = vld [vmem:[%s5 + $0x2c] sm:$0xf]
    %v663 = vld [vmem:[%s5 + $0x30] sm:$0xf]
    %v664 = vld [vmem:[%s5 + $0x34] sm:$0xf]
    %v665 = vld [vmem:[%s5 + $0x38] sm:$0xf]
    %v666 = vld [vmem:[%s5 + $0x3c] sm:$0xf]
    %v667 = vld [vmem:[%s6] sm:$0x1]
    %v669 = vlaneseq
    %v670 = vshrl.u32 %v669, 7
    %v671 = vsub.s32 0, %v670
    %v672 = vrot.slane %v667, %v671
    %v690 = vunpack.c.l.b16 %v651
    %v691 = vunpack.c.l.b16 %v652
    %v692 = vunpack.c.l.b16 %v653
    %v693 = vunpack.c.l.b16 %v654
    %v694 = vunpack.c.l.b16 %v655
    %v695 = vunpack.c.l.b16 %v656
    %v696 = vunpack.c.l.b16 %v657
    %v697 = vunpack.c.l.b16 %v658
    %v698 = vunpack.c.l.b16 %v659
    %v699 = vunpack.c.l.b16 %v660
    %v700 = vunpack.c.l.b16 %v661
    %v701 = vunpack.c.l.b16 %v662
    %v702 = vunpack.c.l.b16 %v663
    %v703 = vunpack.c.l.b16 %v664
    %v704 = vunpack.c.l.b16 %v665
    %v705 = vunpack.c.l.b16 %v666
    %v706 = vpack.c.b16 %v691, %v690
    %v707 = vpack.c.b16 %v693, %v692
    %v708 = vpack.c.b16 %v695, %v694
    %v709 = vpack.c.b16 %v697, %v696
    %v710 = vpack.c.b16 %v699, %v698
    %v711 = vpack.c.b16 %v701, %v700
    %v712 = vpack.c.b16 %v703, %v702
    %v713 = vpack.c.b16 %v705, %v704
    %722 = vmatprep.subr.bf16.mxu0 0
    %723 = vmatpush1.bf16.msra.mxu0 %v713
    %724 = vmatprep.subr.bf16.mxu0 0
    %725 = vmatpush1.bf16.msra.mxu0 %v712
    %726 = vmatprep.subr.bf16.mxu0 0
    %727 = vmatpush1.bf16.msra.mxu0 %v711
    %728 = vmatprep.subr.bf16.mxu0 0
    %729 = vmatpush1.bf16.msra.mxu0 %v710
    %730 = vmatprep.subr.bf16.mxu0 0
    %731 = vmatpush1.bf16.msra.mxu0 %v709
    %732 = vmatprep.subr.bf16.mxu0 0
    %733 = vmatpush1.bf16.msra.mxu0 %v708
    %734 = vmatprep.subr.bf16.mxu0 0
    %735 = vmatpush1.bf16.msra.mxu0 %v707
    %736 = vmatprep.subr.bf16.mxu0 0
    %737 = vmatpush1.bf16.msra.mxu0 %v706
    %738 = vmatprep.subr.bf16.mxu0 0
    %739 = vmatpush2.bf16.msra.mxu0 0
    %740 = vmatprep.subr.bf16.mxu0 0
    %741 = vmatpush2.bf16.msra.mxu0 0
    %742 = vmatprep.subr.bf16.mxu0 0
    %743 = vmatpush2.bf16.msra.mxu0 0
    %744 = vmatprep.subr.bf16.mxu0 0
    %745 = vmatpush2.bf16.msra.mxu0 0
    %746 = vmatprep.subr.bf16.mxu0 0
    %747 = vmatpush2.bf16.msra.mxu0 0
    %748 = vmatprep.subr.bf16.mxu0 0
    %749 = vmatpush2.bf16.msra.mxu0 0
    %750 = vmatprep.subr.bf16.mxu0 0
    %751 = vmatpush2.bf16.msra.mxu0 0
    %752 = vmatprep.subr.bf16.mxu0 0
    %753 = vmatpush2.bf16.msra.mxu0 0
    %754 = vmatprep.mubr.bf16.mxu0 0
    %755 = vmatmul.mubr.bf16.gmra.mxu0 %v650
    %v756 = vpop.f32.mrf.mxu0
    %v757 = vadd.f32 %v672, %v756
    %v758 = vpop.f32.mrf.mxu0
    %v759 = vpop.f32.mrf.mxu0
    %v760 = vpop.f32.mrf.mxu0
    %761 = vdwg.mxu0
    %v762 = vmax.f32 %v757, 0.0
    %v763 = vpack.c.bf16 %v762, %v762
    %v764 = vld [vmem:[%s7] sm:$0xf]
    %v765 = vld [vmem:[%s7 + $0x4] sm:$0xf]
    %v766 = vld [vmem:[%s7 + $0x8] sm:$0xf]
    %v767 = vld [vmem:[%s7 + $0xc] sm:$0xf]
    %v768 = vld [vmem:[%s8] sm:$0x1]
    %v770 = vlaneseq
    %v771 = vshrl.u32 %v770, 7
    %v772 = vsub.s32 0, %v771
    %v773 = vrot.slane %v768, %v772
    %v779 = vunpack.c.l.b16 %v764
    %v780 = vunpack.c.l.b16 %v765
    %v781 = vunpack.c.l.b16 %v766
    %v782 = vunpack.c.l.b16 %v767
    %v783 = vpack.c.b16 %v780, %v779
    %v784 = vpack.c.b16 %v782, %v781
    %vm787 = vcmask 261120
    %v789 = vsel %vm787, %v763, 0
    %791 = vmatprep.subr.bf16.mxu0 0
    %792 = vmatpush1.bf16.msra.mxu0 0
    %793 = vmatprep.subr.bf16.mxu0 0
    %794 = vmatpush1.bf16.msra.mxu0 0
    %795 = vmatprep.subr.bf16.mxu0 0
    %796 = vmatpush1.bf16.msra.mxu0 0
    %797 = vmatprep.subr.bf16.mxu0 0
    %798 = vmatpush1.bf16.msra.mxu0 0
    %799 = vmatprep.subr.bf16.mxu0 0
    %800 = vmatpush1.bf16.msra.mxu0 0
    %801 = vmatprep.subr.bf16.mxu0 0
    %802 = vmatpush1.bf16.msra.mxu0 0
    %803 = vmatprep.subr.bf16.mxu0 0
    %804 = vmatpush1.bf16.msra.mxu0 %v784
    %805 = vmatprep.subr.bf16.mxu0 0
    %806 = vmatpush1.bf16.msra.mxu0 %v783
    %807 = vmatprep.subr.bf16.mxu0 0
    %808 = vmatpush2.bf16.msra.mxu0 0
    %809 = vmatprep.subr.bf16.mxu0 0
    %810 = vmatpush2.bf16.msra.mxu0 0
    %811 = vmatprep.subr.bf16.mxu0 0
    %812 = vmatpush2.bf16.msra.mxu0 0
    %813 = vmatprep.subr.bf16.mxu0 0
    %814 = vmatpush2.bf16.msra.mxu0 0
    %815 = vmatprep.subr.bf16.mxu0 0
    %816 = vmatpush2.bf16.msra.mxu0 0
    %817 = vmatprep.subr.bf16.mxu0 0
    %818 = vmatpush2.bf16.msra.mxu0 0
    %819 = vmatprep.subr.bf16.mxu0 0
    %820 = vmatpush2.bf16.msra.mxu0 0
    %821 = vmatprep.subr.bf16.mxu0 0
    %822 = vmatpush2.bf16.msra.mxu0 0
    %823 = vmatprep.mubr.bf16.mxu0 0
    %824 = vmatmul.mubr.bf16.gmra.mxu0 %v789
    %v825 = vpop.f32.mrf.mxu0
    %v826 = vadd.f32 %v773, %v825
    %v827 = vpop.f32.mrf.mxu0
    %v828 = vpop.f32.mrf.mxu0
    %v829 = vpop.f32.mrf.mxu0
    %830 = vdwg.mxu0
    %v831 = vmax.f32 %v826, 0.0
    %v832 = vpack.c.bf16 %v831, %v831
    %v833 = vld [vmem:[%s9] sm:$0xf]
    %v834 = vld [vmem:[%s9 + $0x4] sm:$0xf]
    %v835 = vld [vmem:[%s9 + $0x8] sm:$0xf]
    %v836 = vld [vmem:[%s10] sm:$0x1]
    %v838 = vlaneseq
    %v839 = vshrl.u32 %v838, 7
    %v840 = vsub.s32 0, %v839
    %v841 = vrot.slane %v836, %v840
    %v846 = vunpack.c.l.b16 %v833
    %v847 = vunpack.c.l.b16 %v834
    %v848 = vunpack.c.l.b16 %v835
    %v849 = vpack.c.b16 %v847, %v846
    %v850 = vpack.c.b16 %v848, %v848
    %vm852 = vcmask 195584
    %v854 = vsel %vm852, %v832, 0
    %v857 = vsel %vm353, %v850, 0
    %859 = vmatprep.subr.bf16.mxu0 0
    %860 = vmatpush1.bf16.msra.mxu0 0
    %861 = vmatprep.subr.bf16.mxu0 0
    %862 = vmatpush1.bf16.msra.mxu0 0
    %863 = vmatprep.subr.bf16.mxu0 0
    %864 = vmatpush1.bf16.msra.mxu0 0
    %865 = vmatprep.subr.bf16.mxu0 0
    %866 = vmatpush1.bf16.msra.mxu0 0
    %867 = vmatprep.subr.bf16.mxu0 0
    %868 = vmatpush1.bf16.msra.mxu0 0
    %869 = vmatprep.subr.bf16.mxu0 0
    %870 = vmatpush1.bf16.msra.mxu0 0
    %871 = vmatprep.subr.bf16.mxu0 0
    %872 = vmatpush1.bf16.msra.mxu0 %v857
    %873 = vmatprep.subr.bf16.mxu0 0
    %874 = vmatpush1.bf16.msra.mxu0 %v849
    %875 = vmatprep.subr.bf16.mxu0 0
    %876 = vmatpush2.bf16.msra.mxu0 0
    %877 = vmatprep.subr.bf16.mxu0 0
    %878 = vmatpush2.bf16.msra.mxu0 0
    %879 = vmatprep.subr.bf16.mxu0 0
    %880 = vmatpush2.bf16.msra.mxu0 0
    %881 = vmatprep.subr.bf16.mxu0 0
    %882 = vmatpush2.bf16.msra.mxu0 0
    %883 = vmatprep.subr.bf16.mxu0 0
    %884 = vmatpush2.bf16.msra.mxu0 0
    %885 = vmatprep.subr.bf16.mxu0 0
    %886 = vmatpush2.bf16.msra.mxu0 0
    %887 = vmatprep.subr.bf16.mxu0 0
    %888 = vmatpush2.bf16.msra.mxu0 0
    %889 = vmatprep.subr.bf16.mxu0 0
    %890 = vmatpush2.bf16.msra.mxu0 0
    %891 = vmatprep.mubr.bf16.mxu0 0
    %892 = vmatmul.mubr.bf16.gmra.mxu0 %v854
    %v893 = vpop.f32.mrf.mxu0
    %v894 = vadd.f32 %v841, %v893
    %v895 = vpop.f32.mrf.mxu0
    %v896 = vpop.f32.mrf.mxu0
    %v897 = vpop.f32.mrf.mxu0
    %898 = vdwg.mxu0
    %899 = vst [vmem:[#allocation6] sm:$0x3] %v894
    // Predicated region
    $region46: #{net_forward.1} parent=1 // pred_check
      _
    $region47: #{net_forward.1} parent=1 // pred_check_branch
      %901 = sbr.rel (0) target = $region49
    $region48: #{net_forward.1} parent=1 // pred_region
      %s903 = ssub.s32 32, 32
      %904 = vsyncadd [#allocation7], %s903
      %s906 = sshll.u32 [#allocation6], 4
      %s907 = int_to_ptr.vmem [resolvable:$true] %s906
      %909 = dma.vmem_to_hbm [thread:$0]  %s907, 32, %s11, [#allocation7]
    $region49: #{net_forward.1} parent=1 // pred_fallthru
      _
    // Predicated region
    $region50: #{net_forward.1} parent=1 // pred_check
      _
    $region51: #{net_forward.1} parent=1 // pred_check_branch
      %911 = sbr.rel (0) target = $region53
    $region52: #{net_forward.1} parent=1 // pred_region
      %912 = dma.done [#allocation7], 32
    $region53: #{net_forward.1} parent=1 // pred_fallthru
      _
    %913 = vsyncpa [#allocation7], 1

</llo_original>
